<compile_context>
chip_gen: v5e
topology: v5e:2x2
jax: 0.10.0
libtpu: 0.0.40
codegen_flags: <defaults>
</compile_context>

<pallas_src>
import functools

import jax
import jax.numpy as jnp
import numpy as np
from jax.experimental import pallas as pl
from jax.experimental.pallas import tpu as pltpu


def _gumbel_kernel(x_ref, rep_ref, s_ref, w1_ref, b1_ref, w2_ref, b2_ref,
                   w3_ref, b3_ref, w4_ref, b4_ref, w5a_ref, w5b_ref, b5_ref,
                   out_ref, *, batch, nodes, hidden):
    B, N, H = batch, nodes, hidden
    x = x_ref[...]                       # (B*N, D)  float32
    cdt = w1_ref.dtype                   # matmul-operand dtype (f32, or bf16 on v6e/v7x)

    # ---- layer 1 (edge1), fused: one matmul yields both halves of the pair ----
    #   y[:, :H] = x @ W1a   (innode  / target-node j term)
    #   y[:, H:] = x @ W1b   (outnode / source-node i term)
    y = jnp.dot(x.astype(cdt), w1_ref[...],
                preferred_element_type=jnp.float32)           # (B*N, 2H)
    xa = y[:, :H] + b1_ref[...]          # bias hoisted: added exactly once
    xb = y[:, H:]

    # ---- build the (B*N*N, H) edge slab; row r = b*N*N + i*N + j ----
    # target-node term: per-batch tile of xa over i (leading-dim broadcast + aligned
    # reshape -> pure retiling, no data movement)
    xa_rep = jnp.broadcast_to(xa.reshape(B, 1, N, H),
                              (B, N, N, H)).reshape(B * N * N, H)
    # source-node term: consecutive row-repeat of xb over j, expressed as a 0/1
    # replication matmul so it runs on the MXU (no cross-sublane broadcasts).
    # Kept in f32: coefficients are exact 0/1.
    xb_rep = jnp.dot(rep_ref[...], xb, preferred_element_type=jnp.float32)
    n2e = jnp.maximum(xa_rep + xb_rep, 0.0)                   # (B*N*N, H)

    # ---- layer 2 (edge2edge): ONE (B*N*N, H) @ (H, H) matmul ----
    e2e = jnp.maximum(
        jnp.dot(n2e.astype(cdt), w2_ref[...],
                preferred_element_type=jnp.float32) + b2_ref[...], 0.0)

    # ---- adjacency-weighted sum over source nodes as a single MXU matmul ----
    #   agg[b*N + j] = sum_i adj[b, i, j] * e2e[b, i, j]
    # S holds exact adj coefficients -> keep this dot in f32 for accuracy.
    agg = jnp.dot(s_ref[...], e2e, preferred_element_type=jnp.float32)   # (B*N, H)

    # ---- node2node / node2node2 ----
    h = jnp.maximum(
        jnp.dot(agg.astype(cdt), w3_ref[...],
                preferred_element_type=jnp.float32) + b3_ref[...], 0.0)
    h = jnp.maximum(
        jnp.dot(h.astype(cdt), w4_ref[...],
                preferred_element_type=jnp.float32) + b4_ref[...], 0.0)

    # ---- output layer on cat(x, h): split matmuls (K=D and K=H) ----
    logits = (jnp.dot(x.astype(cdt), w5a_ref[...], preferred_element_type=jnp.float32)
              + jnp.dot(h.astype(cdt), w5b_ref[...], preferred_element_type=jnp.float32)
              + b5_ref[...])                                   # (B*N, D)

    # ---- log-softmax over the feature axis (dim=2 in PyTorch), all f32 ----
    m = jnp.max(logits, axis=-1, keepdims=True)
    z = logits - m
    lse = jnp.log(jnp.sum(jnp.exp(z), axis=-1, keepdims=True))
    out_ref[...] = (z - lse).astype(out_ref.dtype)


@functools.partial(jax.jit, static_argnames=("matmul_dtype",))
def gumbel_graph_network_clf(x, adj, params, *, matmul_dtype=jnp.float32):
    B, N, D = x.shape
    H = params["W1"].shape[0]
    f32 = jnp.float32

    # ---------------- layout plumbing (plain JAX, outside the kernel) --------
    x_flat = x.reshape(B * N, D).astype(f32)

    # Fused edge1 weight: cat(innode, outnode) @ W1.T == x@W1a + x@W1b with
    #   W1a = W1[:, :D].T  (innode  = x[b, j]),  W1b = W1[:, D:].T (outnode = x[b, i])
    w1 = jnp.concatenate([params["W1"][:, :D].T, params["W1"][:, D:].T], axis=1)  # (D, 2H)
    w2 = params["W2"].T                  # (H, H)
    w3 = params["W3"].T                  # (H, H)
    w4 = params["W4"].T                  # (H, H)
    w5a = params["W5"][:, :D].T          # (D, D)
    w5b = params["W5"][:, D:].T          # (H, D)
    b1 = params["b1"][None, :].astype(f32)
    b2 = params["b2"][None, :].astype(f32)
    b3 = params["b3"][None, :].astype(f32)
    b4 = params["b4"][None, :].astype(f32)
    b5 = params["b5"][None, :].astype(f32)

    # bf16 matmul operands on v6e/v7x (f32 accumulate); elementwise stays f32.
    w1, w2, w3, w4, w5a, w5b = (w.astype(matmul_dtype)
                                for w in (w1, w2, w3, w4, w5a, w5b))

    # 0/1 row-replication matrix:  row b*N*N + i*N + j  <-  source row b*N + i
    rep = jnp.repeat(jnp.eye(B * N, dtype=f32), N, axis=0)     # (B*N*N, B*N)

    # Block-diagonal adjacency selection matrix S (B*N, B*N*N):
    #   S[b*N + j, b*N*N + i*N + j] = adj[b, i, j]
    # so that agg = S @ e2e performs the adjacency-weighted source-node sum
    # as one MXU matmul.  (For large B/N keep S batch-blocked and tile the
    # i axis instead of building the full block diagonal.)
    eye_n = jnp.eye(N, dtype=f32)
    s_blk = adj.astype(f32)[:, :, :, None] * eye_n[None, None, :, :]   # (b, i, j, j2)
    s_blk = jnp.transpose(s_blk, (0, 2, 1, 3)).reshape(B, N, N * N)    # (b, j, i*N+j2)
    eye_b = jnp.eye(B, dtype=f32)
    s_mat = (eye_b[:, None, :, None] * s_blk[:, :, None, :]).reshape(B * N, B * N * N)

    kernel = functools.partial(_gumbel_kernel, batch=B, nodes=N, hidden=H)
    vmem = pl.BlockSpec(memory_space=pltpu.MemorySpace.VMEM)

    # Whole problem (< 100 KB) in a single grid-less invocation: removes the
    # per-step DMA / prologue overhead that dominated the old grid=(B,) version
    # and doubles sublane occupancy (B*N rows per matmul).
    # TODO(synk): for large B on v7x, re-introduce a size-2 "parallel" leading
    # grid axis over the batch so both TensorCores are used; for large N, tile
    # the i (source-node) axis as an "arbitrary" reduction axis to bound the
    # N^2*H edge slab in VMEM.
    out_flat = pl.pallas_call(
        kernel,
        out_shape=jax.ShapeDtypeStruct((B * N, D), f32),
        in_specs=[vmem] * 14,
        out_specs=vmem,
    )(x_flat, rep, s_mat, w1, b1, w2, b2, w3, b3, w4, b4, w5a, w5b, b5)

    return out_flat.reshape(B, N, D)


def init_params(key, input_size, hidden_size):
    D, H = input_size, hidden_size
    ks = jax.random.split(key, 10)
    s = 0.2
    # note: test1/test2/test3 layers of the PyTorch module are unused in forward.
    return {
        "W1": s * jax.random.normal(ks[0], (H, 2 * D), jnp.float32),
        "b1": s * jax.random.normal(ks[1], (H,), jnp.float32),
        "W2": s * jax.random.normal(ks[2], (H, H), jnp.float32),
        "b2": s * jax.random.normal(ks[3], (H,), jnp.float32),
        "W3": s * jax.random.normal(ks[4], (H, H), jnp.float32),
        "b3": s * jax.random.normal(ks[5], (H,), jnp.float32),
        "W4": s * jax.random.normal(ks[6], (H, H), jnp.float32),
        "b4": s * jax.random.normal(ks[7], (H,), jnp.float32),
        "W5": s * jax.random.normal(ks[8], (D, D + H), jnp.float32),
        "b5": s * jax.random.normal(ks[9], (D,), jnp.float32),
    }


def reference_forward(x, adj, params):
    """Pure-JAX mirror of the PyTorch forward, for correctness checking."""
    B, N, D = x.shape
    hp = jax.lax.Precision.HIGHEST
    innode = jnp.broadcast_to(x[:, None, :, :], (B, N, N, D))
    outnode = jnp.transpose(innode, (0, 2, 1, 3))
    pair = jnp.concatenate([innode, outnode], axis=3)
    n2e = jax.nn.relu(jnp.matmul(pair, params["W1"].T, precision=hp) + params["b1"])
    e2e = jax.nn.relu(jnp.matmul(n2e, params["W2"].T, precision=hp) + params["b2"])
    edges = adj[..., None] * e2e
    out = jnp.sum(edges, axis=1)
    out = jax.nn.relu(jnp.matmul(out, params["W3"].T, precision=hp) + params["b3"])
    out = jax.nn.relu(jnp.matmul(out, params["W4"].T, precision=hp) + params["b4"])
    out = jnp.matmul(jnp.concatenate([x, out], axis=-1), params["W5"].T,
                     precision=hp) + params["b5"]
    return jax.nn.log_softmax(out, axis=2)


if __name__ == "__main__":
    B, N, D, H = 2, 8, 4, 32  # batch, nodes, input_size, hidden_size
    key = jax.random.PRNGKey(0)
    kx, ka, kp = jax.random.split(key, 3)
    x = jax.random.normal(kx, (B, N, D), jnp.float32)
    adj = (jax.random.uniform(ka, (B, N, N)) < 0.5).astype(jnp.float32)
    params = init_params(kp, D, H)

    ref = reference_forward(x, adj, params)

    # f32 matmul path (strict check).
    out = jax.block_until_ready(gumbel_graph_network_clf(x, adj, params))
    np.testing.assert_allclose(np.asarray(out), np.asarray(ref),
                               rtol=2e-2, atol=2e-2)

    # bf16 matmul-operand path (v6e/v7x fast path): f32 accumulate, f32
    # elementwise.  Loose tolerance reflects bf16 operand rounding only.
    out_bf16 = jax.block_until_ready(
        gumbel_graph_network_clf(x, adj, params, matmul_dtype=jnp.bfloat16))
    np.testing.assert_allclose(np.asarray(out_bf16), np.asarray(ref),
                               rtol=1e-1, atol=2.5e-1)

    print("KERNEL_OK")
</pallas_src>

<mosaic_0001>
module attributes {stable_mosaic.version = 11 : i64} {
  func.func @_gumbel_kernel(%arg0: memref<16x4xf32, #tpu.memory_space<vmem>>, %arg1: memref<128x16xf32, #tpu.memory_space<vmem>>, %arg2: memref<16x128xf32, #tpu.memory_space<vmem>>, %arg3: memref<4x64xf32, #tpu.memory_space<vmem>>, %arg4: memref<1x32xf32, #tpu.memory_space<vmem>>, %arg5: memref<32x32xf32, #tpu.memory_space<vmem>>, %arg6: memref<1x32xf32, #tpu.memory_space<vmem>>, %arg7: memref<32x32xf32, #tpu.memory_space<vmem>>, %arg8: memref<1x32xf32, #tpu.memory_space<vmem>>, %arg9: memref<32x32xf32, #tpu.memory_space<vmem>>, %arg10: memref<1x32xf32, #tpu.memory_space<vmem>>, %arg11: memref<4x4xf32, #tpu.memory_space<vmem>>, %arg12: memref<32x4xf32, #tpu.memory_space<vmem>>, %arg13: memref<1x4xf32, #tpu.memory_space<vmem>>, %arg14: memref<16x4xf32, #tpu.memory_space<vmem>>) attributes {dimension_semantics = [], scalar_prefetch = 0 : i64, scratch_operands = 0 : i64, tpu.core_type = #tpu.core_type<tc>} {
    %c0 = arith.constant 0 : index
    %c0_0 = arith.constant 0 : index
    %0 = vector.load %arg0[%c0, %c0_0] : memref<16x4xf32, #tpu.memory_space<vmem>>, vector<16x4xf32>
    %c0_1 = arith.constant 0 : index
    %c0_2 = arith.constant 0 : index
    %1 = vector.load %arg3[%c0_1, %c0_2] : memref<4x64xf32, #tpu.memory_space<vmem>>, vector<4x64xf32>
    %cst = arith.constant dense<0.000000e+00> : vector<16x64xf32>
    %2 = tpu.matmul %0, %1, %cst {dimension_numbers = #tpu.dot_dimension_numbers<[1], [0], [0], [1], [0, 0, 1, 1], [], []>} : vector<16x4xf32>, vector<4x64xf32>, vector<16x64xf32> -> vector<16x64xf32>
    %3 = vector.extract_strided_slice %2 {offsets = [0, 0], sizes = [16, 32], strides = [1, 1]} : vector<16x64xf32> to vector<16x32xf32>
    %c0_3 = arith.constant 0 : index
    %c0_4 = arith.constant 0 : index
    %4 = vector.load %arg4[%c0_3, %c0_4] : memref<1x32xf32, #tpu.memory_space<vmem>>, vector<1x32xf32>
    %5 = vector.broadcast %4 : vector<1x32xf32> to vector<16x32xf32>
    %6 = arith.addf %3, %5 : vector<16x32xf32>
    %7 = vector.extract_strided_slice %2 {offsets = [0, 32], sizes = [16, 32], strides = [1, 1]} : vector<16x64xf32> to vector<16x32xf32>
    %8 = vector.shape_cast %6 : vector<16x32xf32> to vector<2x1x8x32xf32>
    %9 = vector.shape_cast %8 : vector<2x1x8x32xf32> to vector<2x1x8x32xf32>
    %10 = vector.broadcast %9 : vector<2x1x8x32xf32> to vector<2x8x8x32xf32>
    %11 = vector.shape_cast %10 : vector<2x8x8x32xf32> to vector<128x32xf32>
    %c0_5 = arith.constant 0 : index
    %c0_6 = arith.constant 0 : index
    %12 = vector.load %arg1[%c0_5, %c0_6] : memref<128x16xf32, #tpu.memory_space<vmem>>, vector<128x16xf32>
    %cst_7 = arith.constant dense<0.000000e+00> : vector<128x32xf32>
    %13 = tpu.matmul %12, %7, %cst_7 {dimension_numbers = #tpu.dot_dimension_numbers<[1], [0], [0], [1], [0, 0, 1, 1], [], []>} : vector<128x16xf32>, vector<16x32xf32>, vector<128x32xf32> -> vector<128x32xf32>
    %14 = arith.addf %11, %13 : vector<128x32xf32>
    %cst_8 = arith.constant 0.000000e+00 : f32
    %15 = vector.broadcast %cst_8 : f32 to vector<128x32xf32>
    %16 = arith.maximumf %14, %15 : vector<128x32xf32>
    %c0_9 = arith.constant 0 : index
    %c0_10 = arith.constant 0 : index
    %17 = vector.load %arg5[%c0_9, %c0_10] : memref<32x32xf32, #tpu.memory_space<vmem>>, vector<32x32xf32>
    %cst_11 = arith.constant dense<0.000000e+00> : vector<128x32xf32>
    %18 = tpu.matmul %16, %17, %cst_11 {dimension_numbers = #tpu.dot_dimension_numbers<[1], [0], [0], [1], [0, 0, 1, 1], [], []>} : vector<128x32xf32>, vector<32x32xf32>, vector<128x32xf32> -> vector<128x32xf32>
    %c0_12 = arith.constant 0 : index
    %c0_13 = arith.constant 0 : index
    %19 = vector.load %arg6[%c0_12, %c0_13] : memref<1x32xf32, #tpu.memory_space<vmem>>, vector<1x32xf32>
    %20 = vector.broadcast %19 : vector<1x32xf32> to vector<128x32xf32>
    %21 = arith.addf %18, %20 : vector<128x32xf32>
    %cst_14 = arith.constant 0.000000e+00 : f32
    %22 = vector.broadcast %cst_14 : f32 to vector<128x32xf32>
    %23 = arith.maximumf %21, %22 : vector<128x32xf32>
    %c0_15 = arith.constant 0 : index
    %c0_16 = arith.constant 0 : index
    %24 = vector.load %arg2[%c0_15, %c0_16] : memref<16x128xf32, #tpu.memory_space<vmem>>, vector<16x128xf32>
    %cst_17 = arith.constant dense<0.000000e+00> : vector<16x32xf32>
    %25 = tpu.matmul %24, %23, %cst_17 {dimension_numbers = #tpu.dot_dimension_numbers<[1], [0], [0], [1], [0, 0, 1, 1], [], []>} : vector<16x128xf32>, vector<128x32xf32>, vector<16x32xf32> -> vector<16x32xf32>
    %c0_18 = arith.constant 0 : index
    %c0_19 = arith.constant 0 : index
    %26 = vector.load %arg7[%c0_18, %c0_19] : memref<32x32xf32, #tpu.memory_space<vmem>>, vector<32x32xf32>
    %cst_20 = arith.constant dense<0.000000e+00> : vector<16x32xf32>
    %27 = tpu.matmul %25, %26, %cst_20 {dimension_numbers = #tpu.dot_dimension_numbers<[1], [0], [0], [1], [0, 0, 1, 1], [], []>} : vector<16x32xf32>, vector<32x32xf32>, vector<16x32xf32> -> vector<16x32xf32>
    %c0_21 = arith.constant 0 : index
    %c0_22 = arith.constant 0 : index
    %28 = vector.load %arg8[%c0_21, %c0_22] : memref<1x32xf32, #tpu.memory_space<vmem>>, vector<1x32xf32>
    %29 = vector.broadcast %28 : vector<1x32xf32> to vector<16x32xf32>
    %30 = arith.addf %27, %29 : vector<16x32xf32>
    %cst_23 = arith.constant 0.000000e+00 : f32
    %31 = vector.broadcast %cst_23 : f32 to vector<16x32xf32>
    %32 = arith.maximumf %30, %31 : vector<16x32xf32>
    %c0_24 = arith.constant 0 : index
    %c0_25 = arith.constant 0 : index
    %33 = vector.load %arg9[%c0_24, %c0_25] : memref<32x32xf32, #tpu.memory_space<vmem>>, vector<32x32xf32>
    %cst_26 = arith.constant dense<0.000000e+00> : vector<16x32xf32>
    %34 = tpu.matmul %32, %33, %cst_26 {dimension_numbers = #tpu.dot_dimension_numbers<[1], [0], [0], [1], [0, 0, 1, 1], [], []>} : vector<16x32xf32>, vector<32x32xf32>, vector<16x32xf32> -> vector<16x32xf32>
    %c0_27 = arith.constant 0 : index
    %c0_28 = arith.constant 0 : index
    %35 = vector.load %arg10[%c0_27, %c0_28] : memref<1x32xf32, #tpu.memory_space<vmem>>, vector<1x32xf32>
    %36 = vector.broadcast %35 : vector<1x32xf32> to vector<16x32xf32>
    %37 = arith.addf %34, %36 : vector<16x32xf32>
    %cst_29 = arith.constant 0.000000e+00 : f32
    %38 = vector.broadcast %cst_29 : f32 to vector<16x32xf32>
    %39 = arith.maximumf %37, %38 : vector<16x32xf32>
    %c0_30 = arith.constant 0 : index
    %c0_31 = arith.constant 0 : index
    %40 = vector.load %arg11[%c0_30, %c0_31] : memref<4x4xf32, #tpu.memory_space<vmem>>, vector<4x4xf32>
    %cst_32 = arith.constant dense<0.000000e+00> : vector<16x4xf32>
    %41 = tpu.matmul %0, %40, %cst_32 {dimension_numbers = #tpu.dot_dimension_numbers<[1], [0], [0], [1], [0, 0, 1, 1], [], []>} : vector<16x4xf32>, vector<4x4xf32>, vector<16x4xf32> -> vector<16x4xf32>
    %c0_33 = arith.constant 0 : index
    %c0_34 = arith.constant 0 : index
    %42 = vector.load %arg12[%c0_33, %c0_34] : memref<32x4xf32, #tpu.memory_space<vmem>>, vector<32x4xf32>
    %cst_35 = arith.constant dense<0.000000e+00> : vector<16x4xf32>
    %43 = tpu.matmul %39, %42, %cst_35 {dimension_numbers = #tpu.dot_dimension_numbers<[1], [0], [0], [1], [0, 0, 1, 1], [], []>} : vector<16x32xf32>, vector<32x4xf32>, vector<16x4xf32> -> vector<16x4xf32>
    %44 = arith.addf %41, %43 : vector<16x4xf32>
    %c0_36 = arith.constant 0 : index
    %c0_37 = arith.constant 0 : index
    %45 = vector.load %arg13[%c0_36, %c0_37] : memref<1x4xf32, #tpu.memory_space<vmem>>, vector<1x4xf32>
    %46 = vector.broadcast %45 : vector<1x4xf32> to vector<16x4xf32>
    %47 = arith.addf %44, %46 : vector<16x4xf32>
    %cst_38 = arith.constant dense<0xFF800000> : vector<16xf32>
    %48 = vector.multi_reduction <maximumf>, %47, %cst_38 [1] : vector<16x4xf32> to vector<16xf32>
    %49 = vector.shape_cast %48 : vector<16xf32> to vector<16x1xf32>
    %50 = vector.broadcast %49 : vector<16x1xf32> to vector<16x4xf32>
    %51 = arith.subf %47, %50 : vector<16x4xf32>
    %52 = math.exp %51 : vector<16x4xf32>
    %cst_39 = arith.constant dense<0.000000e+00> : vector<16xf32>
    %53 = vector.multi_reduction <add>, %52, %cst_39 [1] : vector<16x4xf32> to vector<16xf32>
    %54 = vector.shape_cast %53 : vector<16xf32> to vector<16x1xf32>
    %55 = math.log %54 : vector<16x1xf32>
    %56 = vector.broadcast %55 : vector<16x1xf32> to vector<16x4xf32>
    %57 = arith.subf %51, %56 : vector<16x4xf32>
    %c0_40 = arith.constant 0 : index
    %c0_41 = arith.constant 0 : index
    %58 = vector.load %arg14[%c0_40, %c0_41] : memref<16x4xf32, #tpu.memory_space<vmem>>, vector<16x4xf32>
    tpu.vector_store %arg14[%c0_40, %c0_41], %57 {strides = array<i32>} : memref<16x4xf32, #tpu.memory_space<vmem>>, vector<16x4xf32>,
    return
  }
}

</mosaic_0001>

<llo_original>
// kernel: gumbel_graph_network_clf.1
$region0: #{gumbel_graph_network_clf.1}
  #allocation0 [shape = 'u32[]', space=smem, size = 0x4, offset = 0x4, fixed_abs, tag = 'smem constant byte address 0x4 - core index']
  #allocation1 [shape = 'u32[72,128]{1,0:T(1,128)}', space=vmem, size = 0x9000, scoped, tag = 'internal scratch']
  %s0 = inlined_call_operand.vmem [shape: f32[16,4], index: 0, kind: input, shape index: {}]
  %s1 = inlined_call_operand.vmem [shape: f32[128,16], index: 1, kind: input, shape index: {}]
  %s2 = inlined_call_operand.vmem [shape: f32[16,128], index: 2, kind: input, shape index: {}]
  %s3 = inlined_call_operand.vmem [shape: f32[4,64], index: 3, kind: input, shape index: {}]
  %s4 = inlined_call_operand.vmem [shape: f32[1,32], index: 4, kind: input, shape index: {}]
  %s5 = inlined_call_operand.vmem [shape: f32[32,32], index: 5, kind: input, shape index: {}]
  %s6 = inlined_call_operand.vmem [shape: f32[1,32], index: 6, kind: input, shape index: {}]
  %s7 = inlined_call_operand.vmem [shape: f32[32,32], index: 7, kind: input, shape index: {}]
  %s8 = inlined_call_operand.vmem [shape: f32[1,32], index: 8, kind: input, shape index: {}]
  %s9 = inlined_call_operand.vmem [shape: f32[32,32], index: 9, kind: input, shape index: {}]
  %s10 = inlined_call_operand.vmem [shape: f32[1,32], index: 10, kind: input, shape index: {}]
  %s11 = inlined_call_operand.vmem [shape: f32[4,4], index: 11, kind: input, shape index: {}]
  %s12 = inlined_call_operand.vmem [shape: f32[32,4], index: 12, kind: input, shape index: {}]
  %s13 = inlined_call_operand.vmem [shape: f32[1,4], index: 13, kind: input, shape index: {}]
  %s14 = inlined_call_operand.vmem [shape: f32[16,4], index: 14, kind: output, shape index: {}]
  %s15 = sld [smem:[#allocation0]]
  $region66: #{gumbel_graph_network_clf.1} parent=0
    _
  %s17 = ssub.s32 1, %s15
  %s18 = scalar_select 0, %s17, %s15
  // Predicated region
  $region2: #{gumbel_graph_network_clf.1} parent=0 // pred_check
    _
  $region3: #{gumbel_graph_network_clf.1} parent=0 // pred_check_branch
    %20 = sbr.rel (0) target = $region5
  $region4: #{gumbel_graph_network_clf.1} parent=0 // pred_region
    _
  $region5: #{gumbel_graph_network_clf.1} parent=0 // pred_fallthru
    _
  // Predicated region
  $region6: #{gumbel_graph_network_clf.1} parent=0 // pred_check
    _
  $region7: #{gumbel_graph_network_clf.1} parent=0 // pred_check_branch
    %22 = sbr.rel (0) target = $region9
  $region8: #{gumbel_graph_network_clf.1} parent=0 // pred_region
    _
  $region9: #{gumbel_graph_network_clf.1} parent=0 // pred_fallthru
    _
  // Predicated region
  $region10: #{gumbel_graph_network_clf.1} parent=0 // pred_check
    _
  $region11: #{gumbel_graph_network_clf.1} parent=0 // pred_check_branch
    %24 = sbr.rel (0) target = $region13
  $region12: #{gumbel_graph_network_clf.1} parent=0 // pred_region
    _
  $region13: #{gumbel_graph_network_clf.1} parent=0 // pred_fallthru
    _
  // Predicated region
  $region14: #{gumbel_graph_network_clf.1} parent=0 // pred_check
    _
  $region15: #{gumbel_graph_network_clf.1} parent=0 // pred_check_branch
    %26 = sbr.rel (0) target = $region17
  $region16: #{gumbel_graph_network_clf.1} parent=0 // pred_region
    _
  $region17: #{gumbel_graph_network_clf.1} parent=0 // pred_fallthru
    _
  // Predicated region
  $region18: #{gumbel_graph_network_clf.1} parent=0 // pred_check
    _
  $region19: #{gumbel_graph_network_clf.1} parent=0 // pred_check_branch
    %28 = sbr.rel (0) target = $region21
  $region20: #{gumbel_graph_network_clf.1} parent=0 // pred_region
    _
  $region21: #{gumbel_graph_network_clf.1} parent=0 // pred_fallthru
    _
  // Predicated region
  $region22: #{gumbel_graph_network_clf.1} parent=0 // pred_check
    _
  $region23: #{gumbel_graph_network_clf.1} parent=0 // pred_check_branch
    %30 = sbr.rel (0) target = $region25
  $region24: #{gumbel_graph_network_clf.1} parent=0 // pred_region
    _
  $region25: #{gumbel_graph_network_clf.1} parent=0 // pred_fallthru
    _
  // Predicated region
  $region26: #{gumbel_graph_network_clf.1} parent=0 // pred_check
    _
  $region27: #{gumbel_graph_network_clf.1} parent=0 // pred_check_branch
    %32 = sbr.rel (0) target = $region29
  $region28: #{gumbel_graph_network_clf.1} parent=0 // pred_region
    _
  $region29: #{gumbel_graph_network_clf.1} parent=0 // pred_fallthru
    _
  // Predicated region
  $region30: #{gumbel_graph_network_clf.1} parent=0 // pred_check
    _
  $region31: #{gumbel_graph_network_clf.1} parent=0 // pred_check_branch
    %34 = sbr.rel (0) target = $region33
  $region32: #{gumbel_graph_network_clf.1} parent=0 // pred_region
    _
  $region33: #{gumbel_graph_network_clf.1} parent=0 // pred_fallthru
    _
  // Predicated region
  $region34: #{gumbel_graph_network_clf.1} parent=0 // pred_check
    _
  $region35: #{gumbel_graph_network_clf.1} parent=0 // pred_check_branch
    %36 = sbr.rel (0) target = $region37
  $region36: #{gumbel_graph_network_clf.1} parent=0 // pred_region
    _
  $region37: #{gumbel_graph_network_clf.1} parent=0 // pred_fallthru
    _
  // Predicated region
  $region38: #{gumbel_graph_network_clf.1} parent=0 // pred_check
    _
  $region39: #{gumbel_graph_network_clf.1} parent=0 // pred_check_branch
    %38 = sbr.rel (0) target = $region41
  $region40: #{gumbel_graph_network_clf.1} parent=0 // pred_region
    _
  $region41: #{gumbel_graph_network_clf.1} parent=0 // pred_fallthru
    _
  // Predicated region
  $region42: #{gumbel_graph_network_clf.1} parent=0 // pred_check
    _
  $region43: #{gumbel_graph_network_clf.1} parent=0 // pred_check_branch
    %40 = sbr.rel (0) target = $region45
  $region44: #{gumbel_graph_network_clf.1} parent=0 // pred_region
    _
  $region45: #{gumbel_graph_network_clf.1} parent=0 // pred_fallthru
    _
  // Predicated region
  $region46: #{gumbel_graph_network_clf.1} parent=0 // pred_check
    _
  $region47: #{gumbel_graph_network_clf.1} parent=0 // pred_check_branch
    %42 = sbr.rel (0) target = $region49
  $region48: #{gumbel_graph_network_clf.1} parent=0 // pred_region
    _
  $region49: #{gumbel_graph_network_clf.1} parent=0 // pred_fallthru
    _
  // Predicated region
  $region50: #{gumbel_graph_network_clf.1} parent=0 // pred_check
    _
  $region51: #{gumbel_graph_network_clf.1} parent=0 // pred_check_branch
    %44 = sbr.rel (0) target = $region53
  $region52: #{gumbel_graph_network_clf.1} parent=0 // pred_region
    _
  $region53: #{gumbel_graph_network_clf.1} parent=0 // pred_fallthru
    _
  // Predicated region
  $region54: #{gumbel_graph_network_clf.1} parent=0 // pred_check
    _
  $region55: #{gumbel_graph_network_clf.1} parent=0 // pred_check_branch
    %46 = sbr.rel (0) target = $region57
  $region56: #{gumbel_graph_network_clf.1} parent=0 // pred_region
    _
  $region57: #{gumbel_graph_network_clf.1} parent=0 // pred_fallthru
    _
  %v47 = vld [vmem:[%s0] sm:$0xff]
  %v48 = vld [vmem:[%s0 + $0x8] sm:$0xff]
  %v49 = vld [vmem:[%s3] sm:$0xf]
  %vm50 = vcmask 31744
  %v52 = vsel %vm50, %v47, 0
  %v55 = vsel %vm50, %v48, 0
  %vm57 = vcmask 1043456
  %v59 = vsel %vm57, %v49, 0
  %61 = vmatpush.msra.mxu0 0.0
  %62 = vmatpush.msra.mxu0 0.0
  %63 = vmatpush.msra.mxu0 0.0
  %64 = vmatpush.msra.mxu0 0.0
  %65 = vmatpush.msra.mxu0 0.0
  %66 = vmatpush.msra.mxu0 0.0
  %67 = vmatpush.msra.mxu0 0.0
  %68 = vmatpush.msra.mxu0 0.0
  %69 = vmatpush.msra.mxu0 0.0
  %70 = vmatpush.msra.mxu0 0.0
  %71 = vmatpush.msra.mxu0 0.0
  %72 = vmatpush.msra.mxu0 0.0
  %73 = vmatpush.msra.mxu0 0.0
  %74 = vmatpush.msra.mxu0 0.0
  %75 = vmatpush.msra.mxu0 0.0
  %76 = vmatpush.msra.mxu0 %v59
  %77 = vmatmul.f32.gmra.mxu0 %v52
  %v78 = vpop.f32.mrf.mxu0
  %v79 = vadd.f32 0.0, %v78
  %80 = vmatmul.f32.gmra.mxu0 %v55
  %v81 = vpop.f32.mrf.mxu0
  %v82 = vadd.f32 0.0, %v81
  %83 = vdwg.mxu0
  %v84 = vld [vmem:[%s4] sm:$0x1]
  %v86 = vperm.slane %v84, 0
  %v88 = vadd.f32 %v79, %v86
  %v89 = vadd.f32 %v82, %v86
  %v90 = vld [vmem:[%s1] sm:$0xff]
  %v91 = vld [vmem:[%s1 + $0x8] sm:$0xff]
  %v92 = vld [vmem:[%s1 + $0x10] sm:$0xff]
  %v93 = vld [vmem:[%s1 + $0x18] sm:$0xff]
  %v94 = vld [vmem:[%s1 + $0x20] sm:$0xff]
  %v95 = vld [vmem:[%s1 + $0x28] sm:$0xff]
  %v96 = vld [vmem:[%s1 + $0x30] sm:$0xff]
  %v97 = vld [vmem:[%s1 + $0x38] sm:$0xff]
  %v98 = vld [vmem:[%s1 + $0x40] sm:$0xff]
  %v99 = vld [vmem:[%s1 + $0x48] sm:$0xff]
  %v100 = vld [vmem:[%s1 + $0x50] sm:$0xff]
  %v101 = vld [vmem:[%s1 + $0x58] sm:$0xff]
  %v102 = vld [vmem:[%s1 + $0x60] sm:$0xff]
  %v103 = vld [vmem:[%s1 + $0x68] sm:$0xff]
  %v104 = vld [vmem:[%s1 + $0x70] sm:$0xff]
  %v105 = vld [vmem:[%s1 + $0x78] sm:$0xff]
  %108 = vrot.lane.b32.xlu0 %v79, 96
  %v109 = vpop.permute.xlu0 %108
  %110 = vrot.lane.b32.xlu0 %v82, 96
  %v111 = vpop.permute.xlu0 %110
  %vm114 = vcmask 130048
  %v116 = vsel %vm114, %v90, 0
  %v119 = vsel %vm114, %v91, 0
  %v122 = vsel %vm114, %v92, 0
  %v125 = vsel %vm114, %v93, 0
  %v128 = vsel %vm114, %v94, 0
  %v131 = vsel %vm114, %v95, 0
  %v134 = vsel %vm114, %v96, 0
  %v137 = vsel %vm114, %v97, 0
  %v140 = vsel %vm114, %v98, 0
  %v143 = vsel %vm114, %v99, 0
  %v146 = vsel %vm114, %v100, 0
  %v149 = vsel %vm114, %v101, 0
  %v152 = vsel %vm114, %v102, 0
  %v155 = vsel %vm114, %v103, 0
  %v158 = vsel %vm114, %v104, 0
  %v161 = vsel %vm114, %v105, 0
  %163 = vmatpush.msra.mxu0 0.0
  %164 = vmatpush.msra.mxu0 0.0
  %165 = vmatpush.msra.mxu0 0.0
  %166 = vmatpush.msra.mxu0 0.0
  %167 = vmatpush.msra.mxu0 0.0
  %168 = vmatpush.msra.mxu0 0.0
  %169 = vmatpush.msra.mxu0 0.0
  %170 = vmatpush.msra.mxu0 0.0
  %171 = vmatpush.msra.mxu0 0.0
  %172 = vmatpush.msra.mxu0 0.0
  %173 = vmatpush.msra.mxu0 0.0
  %174 = vmatpush.msra.mxu0 0.0
  %175 = vmatpush.msra.mxu0 0.0
  %176 = vmatpush.msra.mxu0 0.0
  %177 = vmatpush.msra.mxu0 %v111
  %178 = vmatpush.msra.mxu0 %v109
  %179 = vmatmul.f32.gmra.mxu0 %v116
  %v180 = vpop.f32.mrf.mxu0
  %v181 = vadd.f32 0.0, %v180
  %182 = vmatmul.f32.gmra.mxu0 %v119
  %v183 = vpop.f32.mrf.mxu0
  %v184 = vadd.f32 0.0, %v183
  %185 = vmatmul.f32.gmra.mxu0 %v122
  %v186 = vpop.f32.mrf.mxu0
  %v187 = vadd.f32 0.0, %v186
  %188 = vmatmul.f32.gmra.mxu0 %v125
  %v189 = vpop.f32.mrf.mxu0
  %v190 = vadd.f32 0.0, %v189
  %191 = vmatmul.f32.gmra.mxu0 %v128
  %v192 = vpop.f32.mrf.mxu0
  %v193 = vadd.f32 0.0, %v192
  %194 = vmatmul.f32.gmra.mxu0 %v131
  %v195 = vpop.f32.mrf.mxu0
  %v196 = vadd.f32 0.0, %v195
  %197 = vmatmul.f32.gmra.mxu0 %v134
  %v198 = vpop.f32.mrf.mxu0
  %v199 = vadd.f32 0.0, %v198
  %200 = vmatmul.f32.gmra.mxu0 %v137
  %v201 = vpop.f32.mrf.mxu0
  %v202 = vadd.f32 0.0, %v201
  %203 = vmatmul.f32.gmra.mxu0 %v140
  %v204 = vpop.f32.mrf.mxu0
  %v205 = vadd.f32 0.0, %v204
  %206 = vmatmul.f32.gmra.mxu0 %v143
  %v207 = vpop.f32.mrf.mxu0
  %v208 = vadd.f32 0.0, %v207
  %209 = vmatmul.f32.gmra.mxu0 %v146
  %v210 = vpop.f32.mrf.mxu0
  %v211 = vadd.f32 0.0, %v210
  %212 = vmatmul.f32.gmra.mxu0 %v149
  %v213 = vpop.f32.mrf.mxu0
  %v214 = vadd.f32 0.0, %v213
  %215 = vmatmul.f32.gmra.mxu0 %v152
  %v216 = vpop.f32.mrf.mxu0
  %v217 = vadd.f32 0.0, %v216
  %218 = vmatmul.f32.gmra.mxu0 %v155
  %v219 = vpop.f32.mrf.mxu0
  %v220 = vadd.f32 0.0, %v219
  %221 = vmatmul.f32.gmra.mxu0 %v158
  %v222 = vpop.f32.mrf.mxu0
  %v223 = vadd.f32 0.0, %v222
  %224 = vmatmul.f32.gmra.mxu0 %v161
  %v225 = vpop.f32.mrf.mxu0
  %v226 = vadd.f32 0.0, %v225
  %227 = vdwg.mxu0
  %v228 = vadd.f32 %v88, %v181
  %v229 = vadd.f32 %v88, %v184
  %v230 = vadd.f32 %v88, %v187
  %v231 = vadd.f32 %v88, %v190
  %v232 = vadd.f32 %v88, %v193
  %v233 = vadd.f32 %v88, %v196
  %v234 = vadd.f32 %v88, %v199
  %v235 = vadd.f32 %v88, %v202
  %v236 = vadd.f32 %v89, %v205
  %v237 = vadd.f32 %v89, %v208
  %v238 = vadd.f32 %v89, %v211
  %v239 = vadd.f32 %v89, %v214
  %v240 = vadd.f32 %v89, %v217
  %v241 = vadd.f32 %v89, %v220
  %v242 = vadd.f32 %v89, %v223
  %v243 = vadd.f32 %v89, %v226
  %v244 = vmax.f32 %v228, 0.0
  %v245 = vmax.f32 %v229, 0.0
  %v246 = vmax.f32 %v230, 0.0
  %v247 = vmax.f32 %v231, 0.0
  %v248 = vmax.f32 %v232, 0.0
  %v249 = vmax.f32 %v233, 0.0
  %v250 = vmax.f32 %v234, 0.0
  %v251 = vmax.f32 %v235, 0.0
  %v252 = vmax.f32 %v236, 0.0
  %v253 = vmax.f32 %v237, 0.0
  %v254 = vmax.f32 %v238, 0.0
  %v255 = vmax.f32 %v239, 0.0
  %v256 = vmax.f32 %v240, 0.0
  %v257 = vmax.f32 %v241, 0.0
  %v258 = vmax.f32 %v242, 0.0
  %v259 = vmax.f32 %v243, 0.0
  %v260 = vld [vmem:[%s5] sm:$0xff]
  %v261 = vld [vmem:[%s5 + $0x8] sm:$0xff]
  %v262 = vld [vmem:[%s5 + $0x10] sm:$0xff]
  %v263 = vld [vmem:[%s5 + $0x18] sm:$0xff]
  %v264 = vld [vmem:[%s6] sm:$0x1]
  %v266 = vperm.slane %v264, 0
  %vm268 = vcmask 261120
  %v270 = vsel %vm268, %v244, 0
  %v273 = vsel %vm268, %v245, 0
  %v276 = vsel %vm268, %v246, 0
  %v279 = vsel %vm268, %v247, 0
  %v282 = vsel %vm268, %v248, 0
  %v285 = vsel %vm268, %v249, 0
  %v288 = vsel %vm268, %v250, 0
  %v291 = vsel %vm268, %v251, 0
  %v294 = vsel %vm268, %v252, 0
  %v297 = vsel %vm268, %v253, 0
  %v300 = vsel %vm268, %v254, 0
  %v303 = vsel %vm268, %v255, 0
  %v306 = vsel %vm268, %v256, 0
  %v309 = vsel %vm268, %v257, 0
  %v312 = vsel %vm268, %v258, 0
  %v315 = vsel %vm268, %v259, 0
  %317 = vmatpush.msra.mxu0 0.0
  %318 = vmatpush.msra.mxu0 0.0
  %319 = vmatpush.msra.mxu0 0.0
  %320 = vmatpush.msra.mxu0 0.0
  %321 = vmatpush.msra.mxu0 0.0
  %322 = vmatpush.msra.mxu0 0.0
  %323 = vmatpush.msra.mxu0 0.0
  %324 = vmatpush.msra.mxu0 0.0
  %325 = vmatpush.msra.mxu0 0.0
  %326 = vmatpush.msra.mxu0 0.0
  %327 = vmatpush.msra.mxu0 0.0
  %328 = vmatpush.msra.mxu0 0.0
  %329 = vmatpush.msra.mxu0 %v263
  %330 = vmatpush.msra.mxu0 %v262
  %331 = vmatpush.msra.mxu0 %v261
  %332 = vmatpush.msra.mxu0 %v260
  %333 = vmatmul.f32.gmra.mxu0 %v270
  %v334 = vpop.f32.mrf.mxu0
  %v335 = vadd.f32 %v266, %v334
  %336 = vmatmul.f32.gmra.mxu0 %v273
  %v337 = vpop.f32.mrf.mxu0
  %v338 = vadd.f32 %v266, %v337
  %339 = vmatmul.f32.gmra.mxu0 %v276
  %v340 = vpop.f32.mrf.mxu0
  %v341 = vadd.f32 %v266, %v340
  %342 = vmatmul.f32.gmra.mxu0 %v279
  %v343 = vpop.f32.mrf.mxu0
  %v344 = vadd.f32 %v266, %v343
  %345 = vmatmul.f32.gmra.mxu0 %v282
  %v346 = vpop.f32.mrf.mxu0
  %v347 = vadd.f32 %v266, %v346
  %348 = vmatmul.f32.gmra.mxu0 %v285
  %v349 = vpop.f32.mrf.mxu0
  %v350 = vadd.f32 %v266, %v349
  %351 = vmatmul.f32.gmra.mxu0 %v288
  %v352 = vpop.f32.mrf.mxu0
  %v353 = vadd.f32 %v266, %v352
  %354 = vmatmul.f32.gmra.mxu0 %v291
  %v355 = vpop.f32.mrf.mxu0
  %v356 = vadd.f32 %v266, %v355
  %357 = vmatmul.f32.gmra.mxu0 %v294
  %v358 = vpop.f32.mrf.mxu0
  %v359 = vadd.f32 %v266, %v358
  %360 = vmatmul.f32.gmra.mxu0 %v297
  %v361 = vpop.f32.mrf.mxu0
  %v362 = vadd.f32 %v266, %v361
  %363 = vmatmul.f32.gmra.mxu0 %v300
  %v364 = vpop.f32.mrf.mxu0
  %v365 = vadd.f32 %v266, %v364
  %366 = vmatmul.f32.gmra.mxu0 %v303
  %v367 = vpop.f32.mrf.mxu0
  %v368 = vadd.f32 %v266, %v367
  %369 = vmatmul.f32.gmra.mxu0 %v306
  %v370 = vpop.f32.mrf.mxu0
  %v371 = vadd.f32 %v266, %v370
  %372 = vmatmul.f32.gmra.mxu0 %v309
  %v373 = vpop.f32.mrf.mxu0
  %v374 = vadd.f32 %v266, %v373
  %375 = vmatmul.f32.gmra.mxu0 %v312
  %v376 = vpop.f32.mrf.mxu0
  %v377 = vadd.f32 %v266, %v376
  %378 = vmatmul.f32.gmra.mxu0 %v315
  %v379 = vpop.f32.mrf.mxu0
  %v380 = vadd.f32 %v266, %v379
  %381 = vdwg.mxu0
  %v382 = vmax.f32 %v335, 0.0
  %v383 = vmax.f32 %v338, 0.0
  %v384 = vmax.f32 %v341, 0.0
  %v385 = vmax.f32 %v344, 0.0
  %v386 = vmax.f32 %v347, 0.0
  %v387 = vmax.f32 %v350, 0.0
  %v388 = vmax.f32 %v353, 0.0
  %v389 = vmax.f32 %v356, 0.0
  %v390 = vmax.f32 %v359, 0.0
  %v391 = vmax.f32 %v362, 0.0
  %v392 = vmax.f32 %v365, 0.0
  %v393 = vmax.f32 %v368, 0.0
  %v394 = vmax.f32 %v371, 0.0
  %v395 = vmax.f32 %v374, 0.0
  %v396 = vmax.f32 %v377, 0.0
  %v397 = vmax.f32 %v380, 0.0
  %v398 = vld [vmem:[%s2] sm:$0xff]
  %v399 = vld [vmem:[%s2 + $0x8] sm:$0xff]
  %400 = vmatpush.msra.mxu0 %v397
  %401 = vmatpush.msra.mxu0 %v396
  %402 = vmatpush.msra.mxu0 %v395
  %403 = vmatpush.msra.mxu0 %v394
  %404 = vmatpush.msra.mxu0 %v393
  %405 = vmatpush.msra.mxu0 %v392
  %406 = vmatpush.msra.mxu0 %v391
  %407 = vmatpush.msra.mxu0 %v390
  %408 = vmatpush.msra.mxu0 %v389
  %409 = vmatpush.msra.mxu0 %v388
  %410 = vmatpush.msra.mxu0 %v387
  %411 = vmatpush.msra.mxu0 %v386
  %412 = vmatpush.msra.mxu0 %v385
  %413 = vmatpush.msra.mxu0 %v384
  %414 = vmatpush.msra.mxu0 %v383
  %415 = vmatpush.msra.mxu0 %v382
  %416 = vmatmul.f32.gmra.mxu0 %v398
  %v417 = vpop.f32.mrf.mxu0
  %v418 = vadd.f32 0.0, %v417
  %419 = vmatmul.f32.gmra.mxu0 %v399
  %v420 = vpop.f32.mrf.mxu0
  %v421 = vadd.f32 0.0, %v420
  %422 = vdwg.mxu0
  %v423 = vld [vmem:[%s7] sm:$0xff]
  %v424 = vld [vmem:[%s7 + $0x8] sm:$0xff]
  %v425 = vld [vmem:[%s7 + $0x10] sm:$0xff]
  %v426 = vld [vmem:[%s7 + $0x18] sm:$0xff]
  %v427 = vld [vmem:[%s8] sm:$0x1]
  %v429 = vperm.slane %v427, 0
  %v432 = vsel %vm268, %v418, 0
  %v435 = vsel %vm268, %v421, 0
  %437 = vmatpush.msra.mxu0 0.0
  %438 = vmatpush.msra.mxu0 0.0
  %439 = vmatpush.msra.mxu0 0.0
  %440 = vmatpush.msra.mxu0 0.0
  %441 = vmatpush.msra.mxu0 0.0
  %442 = vmatpush.msra.mxu0 0.0
  %443 = vmatpush.msra.mxu0 0.0
  %444 = vmatpush.msra.mxu0 0.0
  %445 = vmatpush.msra.mxu0 0.0
  %446 = vmatpush.msra.mxu0 0.0
  %447 = vmatpush.msra.mxu0 0.0
  %448 = vmatpush.msra.mxu0 0.0
  %449 = vmatpush.msra.mxu0 %v426
  %450 = vmatpush.msra.mxu0 %v425
  %451 = vmatpush.msra.mxu0 %v424
  %452 = vmatpush.msra.mxu0 %v423
  %453 = vmatmul.f32.gmra.mxu0 %v432
  %v454 = vpop.f32.mrf.mxu0
  %v455 = vadd.f32 %v429, %v454
  %456 = vmatmul.f32.gmra.mxu0 %v435
  %v457 = vpop.f32.mrf.mxu0
  %v458 = vadd.f32 %v429, %v457
  %459 = vdwg.mxu0
  %v460 = vmax.f32 %v455, 0.0
  %v461 = vmax.f32 %v458, 0.0
  %v462 = vld [vmem:[%s9] sm:$0xff]
  %v463 = vld [vmem:[%s9 + $0x8] sm:$0xff]
  %v464 = vld [vmem:[%s9 + $0x10] sm:$0xff]
  %v465 = vld [vmem:[%s9 + $0x18] sm:$0xff]
  %v466 = vld [vmem:[%s10] sm:$0x1]
  %v468 = vperm.slane %v466, 0
  %v471 = vsel %vm268, %v460, 0
  %v474 = vsel %vm268, %v461, 0
  %476 = vmatpush.msra.mxu0 0.0
  %477 = vmatpush.msra.mxu0 0.0
  %478 = vmatpush.msra.mxu0 0.0
  %479 = vmatpush.msra.mxu0 0.0
  %480 = vmatpush.msra.mxu0 0.0
  %481 = vmatpush.msra.mxu0 0.0
  %482 = vmatpush.msra.mxu0 0.0
  %483 = vmatpush.msra.mxu0 0.0
  %484 = vmatpush.msra.mxu0 0.0
  %485 = vmatpush.msra.mxu0 0.0
  %486 = vmatpush.msra.mxu0 0.0
  %487 = vmatpush.msra.mxu0 0.0
  %488 = vmatpush.msra.mxu0 %v465
  %489 = vmatpush.msra.mxu0 %v464
  %490 = vmatpush.msra.mxu0 %v463
  %491 = vmatpush.msra.mxu0 %v462
  %492 = vmatmul.f32.gmra.mxu0 %v471
  %v493 = vpop.f32.mrf.mxu0
  %v494 = vadd.f32 %v468, %v493
  %495 = vmatmul.f32.gmra.mxu0 %v474
  %v496 = vpop.f32.mrf.mxu0
  %v497 = vadd.f32 %v468, %v496
  %498 = vdwg.mxu0
  %v499 = vmax.f32 %v494, 0.0
  %v500 = vmax.f32 %v497, 0.0
  %v501 = vld [vmem:[%s11] sm:$0xf]
  %v502 = vld [vmem:[%s12] sm:$0xff]
  %v503 = vld [vmem:[%s12 + $0x8] sm:$0xff]
  %v504 = vld [vmem:[%s12 + $0x10] sm:$0xff]
  %v505 = vld [vmem:[%s12 + $0x18] sm:$0xff]
  %v507 = vsel %vm268, %v499, 0
  %v510 = vsel %vm268, %v500, 0
  %512 = vmatpush.msra.mxu0 0.0
  %513 = vmatpush.msra.mxu0 0.0
  %514 = vmatpush.msra.mxu0 0.0
  %515 = vmatpush.msra.mxu0 0.0
  %516 = vmatpush.msra.mxu0 0.0
  %517 = vmatpush.msra.mxu0 0.0
  %518 = vmatpush.msra.mxu0 0.0
  %519 = vmatpush.msra.mxu0 0.0
  %520 = vmatpush.msra.mxu0 0.0
  %521 = vmatpush.msra.mxu0 0.0
  %522 = vmatpush.msra.mxu0 0.0
  %523 = vmatpush.msra.mxu0 0.0
  %524 = vmatpush.msra.mxu0 %v505
  %525 = vmatpush.msra.mxu0 %v504
  %526 = vmatpush.msra.mxu0 %v503
  %527 = vmatpush.msra.mxu0 %v502
  %528 = vmatmul.f32.gmra.mxu0 %v507
  %v529 = vpop.f32.mrf.mxu0
  %v530 = vadd.f32 0.0, %v529
  %531 = vmatmul.f32.gmra.mxu0 %v510
  %v532 = vpop.f32.mrf.mxu0
  %v533 = vadd.f32 0.0, %v532
  %534 = vdwg.mxu0
  %v536 = vsel %vm57, %v501, 0
  %538 = vmatpush.msra.mxu0 0.0
  %539 = vmatpush.msra.mxu0 0.0
  %540 = vmatpush.msra.mxu0 0.0
  %541 = vmatpush.msra.mxu0 0.0
  %542 = vmatpush.msra.mxu0 0.0
  %543 = vmatpush.msra.mxu0 0.0
  %544 = vmatpush.msra.mxu0 0.0
  %545 = vmatpush.msra.mxu0 0.0
  %546 = vmatpush.msra.mxu0 0.0
  %547 = vmatpush.msra.mxu0 0.0
  %548 = vmatpush.msra.mxu0 0.0
  %549 = vmatpush.msra.mxu0 0.0
  %550 = vmatpush.msra.mxu0 0.0
  %551 = vmatpush.msra.mxu0 0.0
  %552 = vmatpush.msra.mxu0 0.0
  %553 = vmatpush.msra.mxu0 %v536
  %554 = vmatmul.f32.gmra.mxu0 %v52
  %v555 = vpop.f32.mrf.mxu0
  %v556 = vadd.f32 %v530, %v555
  %557 = vmatmul.f32.gmra.mxu0 %v55
  %v558 = vpop.f32.mrf.mxu0
  %v559 = vadd.f32 %v533, %v558
  %560 = vdwg.mxu0
  %v561 = vld [vmem:[%s13] sm:$0x1]
  %v563 = vperm.slane %v561, 0
  %v565 = vadd.f32 %v556, %v563
  %v566 = vadd.f32 %v559, %v563
  %v567 = vsel %vm50, %v565, -inf
  %568 = vmax.xlane.f32.xlu0 %v567
  %v569 = vpop.xlane.xlu0 %568
  %v570 = vsel %vm50, %v566, -inf
  %571 = vmax.xlane.f32.xlu0 %v570
  %v572 = vpop.xlane.xlu0 %571
  %v573 = vsub.f32 %v565, %v569
  %v574 = vsub.f32 %v566, %v572
  %v575 = vmul.f32 %v573, 1.442695
  %v576 = vpow.pop %v575
  %v577 = vmul.f32 %v574, 1.442695
  %v578 = vpow.pop %v577
  %v579 = vsel %vm50, %v576, 0.0
  %580 = vadd.xlane.f32.xlu0 %v579
  %v581 = vpop.xlane.xlu0 %580
  %v582 = vsel %vm50, %v578, 0.0
  %583 = vadd.xlane.f32.xlu0 %v582
  %v584 = vpop.xlane.xlu0 %583
  %v585 = vlog2.pop %v581
  %v586 = vmul.f32 %v585, 0.6931472
  %v587 = vlog2.pop %v584
  %v588 = vmul.f32 %v587, 0.6931472
  %v589 = vsub.f32 %v573, %v586
  %v590 = vsub.f32 %v574, %v588
  %591 = vst.msk [vmem:[%s14] sm:$0xff] %vm50, %v589
  %592 = vst.msk [vmem:[%s14 + $0x8] sm:$0xff] %vm50, %v590
  // Predicated region
  $region58: #{gumbel_graph_network_clf.1} parent=0 // pred_check
    _
  $region59: #{gumbel_graph_network_clf.1} parent=0 // pred_check_branch
    %594 = sbr.rel (0) target = $region61
  $region60: #{gumbel_graph_network_clf.1} parent=0 // pred_region
    _
  $region61: #{gumbel_graph_network_clf.1} parent=0 // pred_fallthru
    _
  // Predicated region
  $region62: #{gumbel_graph_network_clf.1} parent=0 // pred_check
    _
  $region63: #{gumbel_graph_network_clf.1} parent=0 // pred_check_branch
    %596 = sbr.rel (0) target = $region65
  $region64: #{gumbel_graph_network_clf.1} parent=0 // pred_region
    _
  $region65: #{gumbel_graph_network_clf.1} parent=0 // pred_fallthru
    _

</llo_original>
